<compile_context>
chip_gen: v7x
topology: tpu7x:2x2x1
jax: 0.10.0
libtpu: 0.0.40
codegen_flags: <defaults>
</compile_context>

<pallas_src>
import functools

import jax
import jax.numpy as jnp
from jax.experimental import pallas as pl
from jax.experimental.pallas import tpu as pltpu

LANE = 128
SUBLANE = 8
SPLIT_THRESHOLD = 256      # min batch for forcing >= 2 grid steps (v7x megacore)


def _round_up(x, m):
    return ((x + m - 1) // m) * m


def _ae_kernel(x_ref, w1_ref, b1_ref, w2_ref, b2_ref,
               w3_ref, b3_ref, w4_ref, b4_ref, o_ref, xpad_ref):
    """Whole 4-layer MLP for one batch tile, all operands resident in VMEM.

    x_ref is the raw f32 (tm, 200) tile; it is zero-padded to 256 lanes through
    a VMEM scratch so every matmul stays MXU tile-aligned.  Matmul operands are
    bf16, accumulation / bias / sigmoid are f32.
    """
    d0 = x_ref.shape[1]                      # logical feature width (200)

    # In-kernel lane pad (200 -> 256).  Padding lanes are zero, so padded
    # weight rows kill them and real outputs are unaffected.
    xpad_ref[...] = jnp.zeros_like(xpad_ref)
    xpad_ref[:, :d0] = x_ref[...]
    h = xpad_ref[...].astype(jnp.bfloat16)                           # (tm, 256) bf16

    z = jnp.dot(h, w1_ref[...], preferred_element_type=jnp.float32) + b1_ref[...]
    a = jax.nn.sigmoid(z)                                            # (tm, 128) f32

    z = jnp.dot(a.astype(jnp.bfloat16), w2_ref[...],
                preferred_element_type=jnp.float32) + b2_ref[...]
    a = jax.nn.sigmoid(z)                                            # (tm, 128) f32

    z = jnp.dot(a.astype(jnp.bfloat16), w3_ref[...],
                preferred_element_type=jnp.float32) + b3_ref[...]
    a = jax.nn.sigmoid(z)                                            # (tm, 128) f32

    z = jnp.dot(a.astype(jnp.bfloat16), w4_ref[...],
                preferred_element_type=jnp.float32) + b4_ref[...]    # (tm, 256) f32

    # Emit only the 200 logical output lanes (masked tail store, no extra pass).
    o_ref[...] = z[:, :d0].astype(o_ref.dtype)


@functools.partial(jax.jit, static_argnames=("tm",))
def autoencoder_forward(x, packed, *, tm=1024):
    """x: (N, 200) float32.  packed: padded bf16 weights (in,out) + f32 biases (1,out).

    Returns (N, 200) float32, matching the PyTorch forward (bf16 matmul operands).
    The wrapper is a pure pass-through: no padding, casting or slicing passes.
    """
    N, D0 = x.shape
    P0, P1 = packed["w1"].shape              # padded in/out of layer1 (256, 128)
    P2 = packed["w2"].shape[1]               # padded bottleneck (128)
    assert D0 <= P0

    # ---- batch tile selection (shapes are static under jit -> Python ints) ----
    tm = _round_up(max(tm, SUBLANE), SUBLANE)
    if SPLIT_THRESHOLD <= N <= tm:
        # Ensure >= 2 "parallel" grid steps so both v7x TensorCores get work.
        tm = _round_up(-(-N // 2), SUBLANE)
    tm = max(SUBLANE, min(tm, _round_up(N, SUBLANE)))
    grid = (pl.cdiv(N, tm),)                 # partial last block masked by Pallas

    def const_spec(shape):
        # Full-array block, same tile every grid step (weights / biases).
        return pl.BlockSpec(shape, lambda i: (0, 0))

    const_bytes = sum(int(v.size) * v.dtype.itemsize for v in packed.values())
    flops = 2 * N * (P0 * P1 + P1 * P2 + P2 * P1 + P1 * P0)
    transcendentals = N * (P1 + P2 + P1)                 # three sigmoid layers
    bytes_accessed = N * D0 * 4 * 2 + const_bytes        # f32 X read + f32 out write

    out = pl.pallas_call(
        _ae_kernel,
        out_shape=jax.ShapeDtypeStruct((N, D0), jnp.float32),
        grid_spec=pltpu.PrefetchScalarGridSpec(
            num_scalar_prefetch=0,
            grid=grid,
            in_specs=[
                pl.BlockSpec((tm, D0), lambda i: (i, 0)),        # raw f32 X tile
                const_spec((P0, P1)), const_spec((1, P1)),       # layer1
                const_spec((P1, P2)), const_spec((1, P2)),       # layer2
                const_spec((P2, P1)), const_spec((1, P1)),       # layer3
                const_spec((P1, P0)), const_spec((1, P0)),       # layer4
            ],
            out_specs=pl.BlockSpec((tm, D0), lambda i: (i, 0)),  # logical output tile
            scratch_shapes=[pltpu.VMEM((tm, P0), jnp.float32)],  # lane-pad staging
        ),
        compiler_params=pltpu.CompilerParams(
            dimension_semantics=("parallel",),
        ),
        cost_estimate=pl.CostEstimate(
            flops=flops,
            transcendentals=transcendentals,
            bytes_accessed=bytes_accessed,
        ),
    )(x, packed["w1"], packed["b1"], packed["w2"], packed["b2"],
      packed["w3"], packed["b3"], packed["w4"], packed["b4"])

    return out


def init_params(key, number=(200, 100, 50)):
    """f32 params matching nn.Linear default init, stored as W^T = (in, out)."""
    d0, d1, d2 = number
    dims = [(d0, d1), (d1, d2), (d2, d1), (d1, d0)]
    params = {}
    keys = jax.random.split(key, 2 * len(dims))
    for li, (fan_in, fan_out) in enumerate(dims, start=1):
        bound = 1.0 / jnp.sqrt(fan_in)   # U(-1/sqrt(in), 1/sqrt(in))
        params[f"w{li}"] = jax.random.uniform(
            keys[2 * (li - 1)], (fan_in, fan_out), jnp.float32, -bound, bound)
        params[f"b{li}"] = jax.random.uniform(
            keys[2 * (li - 1) + 1], (1, fan_out), jnp.float32, -bound, bound)
    return params


def pack_params(params):
    """Zero-pad every (in,out) weight / (1,out) bias to 128-multiples; weights -> bf16.

    Invariant (asserted): padded weight rows/cols and padded bias lanes are
    exactly zero, so padded hidden lanes (sigmoid(0)=0.5) never influence real
    outputs.
    """
    packed = {}
    for li in range(1, 5):
        w = params[f"w{li}"]
        b = params[f"b{li}"]
        pin = _round_up(w.shape[0], LANE)
        pout = _round_up(w.shape[1], LANE)
        wp = jnp.pad(w, ((0, pin - w.shape[0]), (0, pout - w.shape[1]))).astype(jnp.bfloat16)
        bp = jnp.pad(b, ((0, 0), (0, pout - b.shape[1]))).astype(jnp.float32)
        # Defensive check of the zero-padding invariant.
        assert float(jnp.abs(wp[w.shape[0]:, :]).sum()) == 0.0
        assert float(jnp.abs(wp[:, w.shape[1]:]).sum()) == 0.0
        assert float(jnp.abs(bp[:, b.shape[1]:]).sum()) == 0.0
        packed[f"w{li}"] = wp
        packed[f"b{li}"] = bp
    return packed


def reference_forward_f32(x, params):
    h = jax.nn.sigmoid(x @ params["w1"] + params["b1"])
    h = jax.nn.sigmoid(h @ params["w2"] + params["b2"])
    h = jax.nn.sigmoid(h @ params["w3"] + params["b3"])
    return h @ params["w4"] + params["b4"]


def reference_forward_bf16(x, params):
    """Same math as the kernel: bf16 matmul operands, f32 accumulation/sigmoid."""
    def mm(a, w):
        return jnp.dot(a.astype(jnp.bfloat16), w.astype(jnp.bfloat16),
                       preferred_element_type=jnp.float32)
    h = jax.nn.sigmoid(mm(x, params["w1"]) + params["b1"])
    h = jax.nn.sigmoid(mm(h, params["w2"]) + params["b2"])
    h = jax.nn.sigmoid(mm(h, params["w3"]) + params["b3"])
    return mm(h, params["w4"]) + params["b4"]


if __name__ == "__main__":
    key = jax.random.PRNGKey(0)
    k_x, k_x2, k_x3, k_p = jax.random.split(key, 4)

    number = (200, 100, 50)   # Linear(200,100), (100,50), (50,100), (100,200)
    params = init_params(k_p, number)
    packed = pack_params(params)

    # Case 1: tiny batch like the module's self.X demo usage (single grid step).
    N = 8
    x = jax.random.normal(k_x, (N, number[0]), dtype=jnp.float32)
    out = jax.block_until_ready(autoencoder_forward(x, packed))
    assert out.shape == (N, number[0])
    assert bool(jnp.isfinite(out).all())
    assert jnp.allclose(out, reference_forward_bf16(x, params), atol=1e-3, rtol=1e-3)
    assert jnp.allclose(out, reference_forward_f32(x, params), atol=5e-2, rtol=5e-2)

    # Case 2: ragged batch with a partial last grid block (no wrapper row padding).
    N2 = 300
    x2 = jax.random.normal(k_x2, (N2, number[0]), dtype=jnp.float32)
    out2 = jax.block_until_ready(autoencoder_forward(x2, packed, tm=128))
    assert out2.shape == (N2, number[0])
    assert bool(jnp.isfinite(out2).all())   # no NaN/Inf leak from masked OOB rows
    assert jnp.allclose(out2, reference_forward_bf16(x2, params), atol=1e-3, rtol=1e-3)
    assert jnp.allclose(out2, reference_forward_f32(x2, params), atol=5e-2, rtol=5e-2)

    # Case 3: mid-sized batch with the default tile -> auto-split into 2 parallel
    # grid steps (exercises the v7x two-TensorCore path; harmless on v5e/v6e).
    N3 = 384
    x3 = jax.random.normal(k_x3, (N3, number[0]), dtype=jnp.float32)
    out3 = jax.block_until_ready(autoencoder_forward(x3, packed))
    assert out3.shape == (N3, number[0])
    assert bool(jnp.isfinite(out3).all())
    assert jnp.allclose(out3, reference_forward_bf16(x3, params), atol=1e-3, rtol=1e-3)
    assert jnp.allclose(out3, reference_forward_f32(x3, params), atol=5e-2, rtol=5e-2)

    print("KERNEL_OK")
</pallas_src>

<mosaic_0001>
module attributes {stable_mosaic.version = 11 : i64} {
  func.func @_ae_kernel(%arg0: i32, %arg1: memref<8x200xf32, #tpu.memory_space<vmem>>, %arg2: memref<256x128xbf16, #tpu.memory_space<vmem>>, %arg3: memref<1x128xf32, #tpu.memory_space<vmem>>, %arg4: memref<128x128xbf16, #tpu.memory_space<vmem>>, %arg5: memref<1x128xf32, #tpu.memory_space<vmem>>, %arg6: memref<128x128xbf16, #tpu.memory_space<vmem>>, %arg7: memref<1x128xf32, #tpu.memory_space<vmem>>, %arg8: memref<128x256xbf16, #tpu.memory_space<vmem>>, %arg9: memref<1x256xf32, #tpu.memory_space<vmem>>, %arg10: memref<8x200xf32, #tpu.memory_space<vmem>>, %arg11: memref<8x256xf32, #tpu.memory_space<vmem>>) attributes {dimension_semantics = [#tpu.dimension_semantics<parallel>], iteration_bounds = array<i64: 1>, scalar_prefetch = 0 : i64, scratch_operands = 1 : i64, tpu.core_type = #tpu.core_type<tc>, window_params = [{transform_indices = @transform_0, window_bounds = array<i64: 8, 200>}, {pipeline_mode = #tpu.pipeline_mode<synchronous>, transform_indices = @transform_1, window_bounds = array<i64: 256, 128>}, {pipeline_mode = #tpu.pipeline_mode<synchronous>, transform_indices = @transform_2, window_bounds = array<i64: 1, 128>}, {pipeline_mode = #tpu.pipeline_mode<synchronous>, transform_indices = @transform_3, window_bounds = array<i64: 128, 128>}, {pipeline_mode = #tpu.pipeline_mode<synchronous>, transform_indices = @transform_4, window_bounds = array<i64: 1, 128>}, {pipeline_mode = #tpu.pipeline_mode<synchronous>, transform_indices = @transform_5, window_bounds = array<i64: 128, 128>}, {pipeline_mode = #tpu.pipeline_mode<synchronous>, transform_indices = @transform_6, window_bounds = array<i64: 1, 128>}, {pipeline_mode = #tpu.pipeline_mode<synchronous>, transform_indices = @transform_7, window_bounds = array<i64: 128, 256>}, {pipeline_mode = #tpu.pipeline_mode<synchronous>, transform_indices = @transform_8, window_bounds = array<i64: 1, 256>}, {transform_indices = @transform_9, window_bounds = array<i64: 8, 200>}]} {
    %cst = arith.constant 0.000000e+00 : f32
    %0 = vector.broadcast %cst : f32 to vector<8x256xf32>
    %c0 = arith.constant 0 : index
    %c0_0 = arith.constant 0 : index
    %1 = vector.load %arg11[%c0, %c0_0] : memref<8x256xf32, #tpu.memory_space<vmem>>, vector<8x256xf32>
    tpu.vector_store %arg11[%c0, %c0_0], %0 {strides = array<i32>} : memref<8x256xf32, #tpu.memory_space<vmem>>, vector<8x256xf32>,
    %c0_1 = arith.constant 0 : index
    %c0_2 = arith.constant 0 : index
    %2 = vector.load %arg1[%c0_1, %c0_2] : memref<8x200xf32, #tpu.memory_space<vmem>>, vector<8x200xf32>
    %c0_3 = arith.constant 0 : index
    %c0_4 = arith.constant 0 : index
    %3 = vector.load %arg11[%c0_3, %c0_4] : memref<8x256xf32, #tpu.memory_space<vmem>>, vector<8x200xf32>
    tpu.vector_store %arg11[%c0_3, %c0_4], %2 {strides = array<i32>} : memref<8x256xf32, #tpu.memory_space<vmem>>, vector<8x200xf32>,
    %c0_5 = arith.constant 0 : index
    %c0_6 = arith.constant 0 : index
    %4 = vector.load %arg11[%c0_5, %c0_6] : memref<8x256xf32, #tpu.memory_space<vmem>>, vector<8x256xf32>
    %5 = arith.truncf %4 : vector<8x256xf32> to vector<8x256xbf16>
    %c0_7 = arith.constant 0 : index
    %c0_8 = arith.constant 0 : index
    %6 = vector.load %arg2[%c0_7, %c0_8] : memref<256x128xbf16, #tpu.memory_space<vmem>>, vector<256x128xbf16>
    %cst_9 = arith.constant dense<0.000000e+00> : vector<8x128xf32>
    %7 = tpu.matmul %5, %6, %cst_9 {dimension_numbers = #tpu.dot_dimension_numbers<[1], [0], [0], [1], [0, 0, 1, 1], [], []>} : vector<8x256xbf16>, vector<256x128xbf16>, vector<8x128xf32> -> vector<8x128xf32>
    %c0_10 = arith.constant 0 : index
    %c0_11 = arith.constant 0 : index
    %8 = vector.load %arg3[%c0_10, %c0_11] : memref<1x128xf32, #tpu.memory_space<vmem>>, vector<1x128xf32>
    %9 = vector.broadcast %8 : vector<1x128xf32> to vector<8x128xf32>
    %10 = arith.addf %7, %9 : vector<8x128xf32>
    %11 = arith.negf %10 : vector<8x128xf32>
    %12 = math.exp %11 : vector<8x128xf32>
    %cst_12 = arith.constant 1.000000e+00 : f32
    %13 = vector.broadcast %cst_12 : f32 to vector<8x128xf32>
    %14 = arith.addf %13, %12 : vector<8x128xf32>
    %15 = arith.divf %13, %14 : vector<8x128xf32>
    %16 = arith.truncf %15 : vector<8x128xf32> to vector<8x128xbf16>
    %c0_13 = arith.constant 0 : index
    %c0_14 = arith.constant 0 : index
    %17 = vector.load %arg4[%c0_13, %c0_14] : memref<128x128xbf16, #tpu.memory_space<vmem>>, vector<128x128xbf16>
    %cst_15 = arith.constant dense<0.000000e+00> : vector<8x128xf32>
    %18 = tpu.matmul %16, %17, %cst_15 {dimension_numbers = #tpu.dot_dimension_numbers<[1], [0], [0], [1], [0, 0, 1, 1], [], []>} : vector<8x128xbf16>, vector<128x128xbf16>, vector<8x128xf32> -> vector<8x128xf32>
    %c0_16 = arith.constant 0 : index
    %c0_17 = arith.constant 0 : index
    %19 = vector.load %arg5[%c0_16, %c0_17] : memref<1x128xf32, #tpu.memory_space<vmem>>, vector<1x128xf32>
    %20 = vector.broadcast %19 : vector<1x128xf32> to vector<8x128xf32>
    %21 = arith.addf %18, %20 : vector<8x128xf32>
    %22 = arith.negf %21 : vector<8x128xf32>
    %23 = math.exp %22 : vector<8x128xf32>
    %cst_18 = arith.constant 1.000000e+00 : f32
    %24 = vector.broadcast %cst_18 : f32 to vector<8x128xf32>
    %25 = arith.addf %24, %23 : vector<8x128xf32>
    %26 = arith.divf %24, %25 : vector<8x128xf32>
    %27 = arith.truncf %26 : vector<8x128xf32> to vector<8x128xbf16>
    %c0_19 = arith.constant 0 : index
    %c0_20 = arith.constant 0 : index
    %28 = vector.load %arg6[%c0_19, %c0_20] : memref<128x128xbf16, #tpu.memory_space<vmem>>, vector<128x128xbf16>
    %cst_21 = arith.constant dense<0.000000e+00> : vector<8x128xf32>
    %29 = tpu.matmul %27, %28, %cst_21 {dimension_numbers = #tpu.dot_dimension_numbers<[1], [0], [0], [1], [0, 0, 1, 1], [], []>} : vector<8x128xbf16>, vector<128x128xbf16>, vector<8x128xf32> -> vector<8x128xf32>
    %c0_22 = arith.constant 0 : index
    %c0_23 = arith.constant 0 : index
    %30 = vector.load %arg7[%c0_22, %c0_23] : memref<1x128xf32, #tpu.memory_space<vmem>>, vector<1x128xf32>
    %31 = vector.broadcast %30 : vector<1x128xf32> to vector<8x128xf32>
    %32 = arith.addf %29, %31 : vector<8x128xf32>
    %33 = arith.negf %32 : vector<8x128xf32>
    %34 = math.exp %33 : vector<8x128xf32>
    %cst_24 = arith.constant 1.000000e+00 : f32
    %35 = vector.broadcast %cst_24 : f32 to vector<8x128xf32>
    %36 = arith.addf %35, %34 : vector<8x128xf32>
    %37 = arith.divf %35, %36 : vector<8x128xf32>
    %38 = arith.truncf %37 : vector<8x128xf32> to vector<8x128xbf16>
    %c0_25 = arith.constant 0 : index
    %c0_26 = arith.constant 0 : index
    %39 = vector.load %arg8[%c0_25, %c0_26] : memref<128x256xbf16, #tpu.memory_space<vmem>>, vector<128x256xbf16>
    %cst_27 = arith.constant dense<0.000000e+00> : vector<8x256xf32>
    %40 = tpu.matmul %38, %39, %cst_27 {dimension_numbers = #tpu.dot_dimension_numbers<[1], [0], [0], [1], [0, 0, 1, 1], [], []>} : vector<8x128xbf16>, vector<128x256xbf16>, vector<8x256xf32> -> vector<8x256xf32>
    %c0_28 = arith.constant 0 : index
    %c0_29 = arith.constant 0 : index
    %41 = vector.load %arg9[%c0_28, %c0_29] : memref<1x256xf32, #tpu.memory_space<vmem>>, vector<1x256xf32>
    %42 = vector.broadcast %41 : vector<1x256xf32> to vector<8x256xf32>
    %43 = arith.addf %40, %42 : vector<8x256xf32>
    %44 = vector.extract_strided_slice %43 {offsets = [0, 0], sizes = [8, 200], strides = [1, 1]} : vector<8x256xf32> to vector<8x200xf32>
    %c0_30 = arith.constant 0 : index
    %c0_31 = arith.constant 0 : index
    %45 = vector.load %arg10[%c0_30, %c0_31] : memref<8x200xf32, #tpu.memory_space<vmem>>, vector<8x200xf32>
    tpu.vector_store %arg10[%c0_30, %c0_31], %44 {strides = array<i32>} : memref<8x200xf32, #tpu.memory_space<vmem>>, vector<8x200xf32>,
    return
  }
  func.func @transform_0(%arg0: i32) -> (i32, i32) {
    %c0_i32 = arith.constant 0 : i32
    %c0_i32_0 = arith.constant 0 : i32
    return %arg0, %c0_i32 : i32, i32
  }
  func.func @transform_1(%arg0: i32) -> (i32, i32) {
    %c0_i32 = arith.constant 0 : i32
    %c0_i32_0 = arith.constant 0 : i32
    %c0_i32_1 = arith.constant 0 : i32
    return %c0_i32, %c0_i32_0 : i32, i32
  }
  func.func @transform_2(%arg0: i32) -> (i32, i32) {
    %c0_i32 = arith.constant 0 : i32
    %c0_i32_0 = arith.constant 0 : i32
    %c0_i32_1 = arith.constant 0 : i32
    return %c0_i32, %c0_i32_0 : i32, i32
  }
  func.func @transform_3(%arg0: i32) -> (i32, i32) {
    %c0_i32 = arith.constant 0 : i32
    %c0_i32_0 = arith.constant 0 : i32
    %c0_i32_1 = arith.constant 0 : i32
    return %c0_i32, %c0_i32_0 : i32, i32
  }
  func.func @transform_4(%arg0: i32) -> (i32, i32) {
    %c0_i32 = arith.constant 0 : i32
    %c0_i32_0 = arith.constant 0 : i32
    %c0_i32_1 = arith.constant 0 : i32
    return %c0_i32, %c0_i32_0 : i32, i32
  }
  func.func @transform_5(%arg0: i32) -> (i32, i32) {
    %c0_i32 = arith.constant 0 : i32
    %c0_i32_0 = arith.constant 0 : i32
    %c0_i32_1 = arith.constant 0 : i32
    return %c0_i32, %c0_i32_0 : i32, i32
  }
  func.func @transform_6(%arg0: i32) -> (i32, i32) {
    %c0_i32 = arith.constant 0 : i32
    %c0_i32_0 = arith.constant 0 : i32
    %c0_i32_1 = arith.constant 0 : i32
    return %c0_i32, %c0_i32_0 : i32, i32
  }
  func.func @transform_7(%arg0: i32) -> (i32, i32) {
    %c0_i32 = arith.constant 0 : i32
    %c0_i32_0 = arith.constant 0 : i32
    %c0_i32_1 = arith.constant 0 : i32
    return %c0_i32, %c0_i32_0 : i32, i32
  }
  func.func @transform_8(%arg0: i32) -> (i32, i32) {
    %c0_i32 = arith.constant 0 : i32
    %c0_i32_0 = arith.constant 0 : i32
    %c0_i32_1 = arith.constant 0 : i32
    return %c0_i32, %c0_i32_0 : i32, i32
  }
  func.func @transform_9(%arg0: i32) -> (i32, i32) {
    %c0_i32 = arith.constant 0 : i32
    %c0_i32_0 = arith.constant 0 : i32
    return %arg0, %c0_i32 : i32, i32
  }
}

</mosaic_0001>

<llo_original>
// kernel: autoencoder_forward.1
$region0: #{autoencoder_forward.1}
  #allocation0 [shape = 'u32[]', space=smem, size = 0x4, offset = 0x4, fixed_abs, tag = 'smem constant byte address 0x4 - core index']
  #allocation1 [shape = 'u32[144,128]{1,0:T(1,128)}', space=vmem, size = 0x12000, scoped, tag = 'internal scratch']
  #allocation2 [shape = 'f32[8,256]{1,0:T(8,128)}', space=vmem, size = 0x2000, scoped, tag = 'scratch operand']
  %s0 = inlined_call_operand.hbm [shape: f32[8,200], index: 0, kind: input, shape index: {}]
  %s1 = inlined_call_operand.hbm [shape: bf16[256,128], index: 1, kind: input, shape index: {}]
  %s2 = inlined_call_operand.vmem [shape: f32[1,128], index: 2, kind: input, shape index: {}]
  %s3 = inlined_call_operand.hbm [shape: bf16[128,128], index: 3, kind: input, shape index: {}]
  %s4 = inlined_call_operand.vmem [shape: f32[1,128], index: 4, kind: input, shape index: {}]
  %s5 = inlined_call_operand.hbm [shape: bf16[128,128], index: 5, kind: input, shape index: {}]
  %s6 = inlined_call_operand.vmem [shape: f32[1,128], index: 6, kind: input, shape index: {}]
  %s7 = inlined_call_operand.hbm [shape: bf16[128,256], index: 7, kind: input, shape index: {}]
  %s8 = inlined_call_operand.vmem [shape: f32[1,256], index: 8, kind: input, shape index: {}]
  %s9 = inlined_call_operand.hbm [shape: f32[8,200], index: 9, kind: output, shape index: {}]
  %s10 = sld [smem:[#allocation0]]
  $region66: #{autoencoder_forward.1} parent=0
    _
  %s12 = ssub.s32 1, %s10
  %s13 = scalar_select 0, %s12, %s10
  $region1: #{autoencoder_forward.1} parent=0
    #allocation3 [shape = 'u8[8192]{0}', space=vmem, size = 0x2000, scoped, tag = 'input window, operand 0, single buffered']
    #allocation4 [shape = 's32[1]{0}', space=sflag, size = 0x4, scoped, tag = 'scoped memory for autoencoder_forward.1']
    #allocation5 [shape = 's32[1]{0}', space=sflag, size = 0x4, scoped, tag = 'scoped memory for autoencoder_forward.1']
    #allocation6 [shape = 'u8[65536]{0}', space=vmem, size = 0x10000, scoped, tag = 'input window, operand 1, single buffered']
    #allocation7 [shape = 's32[1]{0}', space=sflag, size = 0x4, scoped, tag = 'scoped memory for autoencoder_forward.1']
    #allocation8 [shape = 'u8[32768]{0}', space=vmem, size = 0x8000, scoped, tag = 'input window, operand 3, single buffered']
    #allocation9 [shape = 'u8[32768]{0}', space=vmem, size = 0x8000, scoped, tag = 'input window, operand 5, single buffered']
    #allocation10 [shape = 's32[1]{0}', space=sflag, size = 0x4, scoped, tag = 'scoped memory for autoencoder_forward.1']
    #allocation11 [shape = 'u8[65536]{0}', space=vmem, size = 0x10000, scoped, tag = 'input window, operand 7, single buffered']
    #allocation12 [shape = 'u8[8192]{0}', space=vmem, size = 0x2000, scoped, tag = 'output window, operand 0, single buffered']
    %14 = vsyncpa [#allocation4], 0
    %15 = vsyncpa [#allocation7], 0
    %16 = vsyncpa [#allocation10], 0
    %17 = vsyncpa [#allocation5], 0
    // Predicated region
    $region2: #{autoencoder_forward.1} parent=1 // pred_check
      _
    $region3: #{autoencoder_forward.1} parent=1 // pred_check_branch
      %19 = sbr.rel (0) target = $region5
    $region4: #{autoencoder_forward.1} parent=1 // pred_region
      %s21 = ssub.s32 256, 256
      %22 = vsyncadd [#allocation4], %s21
      %s24 = sshll.u32 [#allocation3], 4
      %s25 = int_to_ptr.vmem [resolvable:$true] %s24
      %27 = dma.hbm_to_vmem [thread:$0]  %s0, 256, %s25, [#allocation4]
    $region5: #{autoencoder_forward.1} parent=1 // pred_fallthru
      _
    // Predicated region
    $region6: #{autoencoder_forward.1} parent=1 // pred_check
      _
    $region7: #{autoencoder_forward.1} parent=1 // pred_check_branch
      %29 = sbr.rel (0) target = $region9
    $region8: #{autoencoder_forward.1} parent=1 // pred_region
      %s31 = ssub.s32 2048, 2048
      %32 = vsyncadd [#allocation7], %s31
      %s33 = sshll.u32 [#allocation6], 4
      %s34 = int_to_ptr.vmem [resolvable:$true] %s33
      %39 = dma.hbm_to_vmem [thread:$0]  %s1, 2048, %s34, [#allocation7], 64, 64, 4
    $region9: #{autoencoder_forward.1} parent=1 // pred_fallthru
      _
    // Predicated region
    $region10: #{autoencoder_forward.1} parent=1 // pred_check
      _
    $region11: #{autoencoder_forward.1} parent=1 // pred_check_branch
      %41 = sbr.rel (0) target = $region13
    $region12: #{autoencoder_forward.1} parent=1 // pred_region
      _
    $region13: #{autoencoder_forward.1} parent=1 // pred_fallthru
      _
    // Predicated region
    $region14: #{autoencoder_forward.1} parent=1 // pred_check
      _
    $region15: #{autoencoder_forward.1} parent=1 // pred_check_branch
      %43 = sbr.rel (0) target = $region17
    $region16: #{autoencoder_forward.1} parent=1 // pred_region
      %s45 = ssub.s32 1024, 1024
      %46 = vsyncadd [#allocation7], %s45
      %s47 = sshll.u32 [#allocation8], 4
      %s48 = int_to_ptr.vmem [resolvable:$true] %s47
      %53 = dma.hbm_to_vmem [thread:$0]  %s3, 1024, %s48, [#allocation7], 64, 64, 4
    $region17: #{autoencoder_forward.1} parent=1 // pred_fallthru
      _
    // Predicated region
    $region18: #{autoencoder_forward.1} parent=1 // pred_check
      _
    $region19: #{autoencoder_forward.1} parent=1 // pred_check_branch
      %55 = sbr.rel (0) target = $region21
    $region20: #{autoencoder_forward.1} parent=1 // pred_region
      _
    $region21: #{autoencoder_forward.1} parent=1 // pred_fallthru
      _
    // Predicated region
    $region22: #{autoencoder_forward.1} parent=1 // pred_check
      _
    $region23: #{autoencoder_forward.1} parent=1 // pred_check_branch
      %57 = sbr.rel (0) target = $region25
    $region24: #{autoencoder_forward.1} parent=1 // pred_region
      %s59 = ssub.s32 1024, 1024
      %60 = vsyncadd [#allocation10], %s59
      %s61 = sshll.u32 [#allocation9], 4
      %s62 = int_to_ptr.vmem [resolvable:$true] %s61
      %67 = dma.hbm_to_vmem [thread:$0]  %s5, 1024, %s62, [#allocation10], 64, 64, 4
    $region25: #{autoencoder_forward.1} parent=1 // pred_fallthru
      _
    // Predicated region
    $region26: #{autoencoder_forward.1} parent=1 // pred_check
      _
    $region27: #{autoencoder_forward.1} parent=1 // pred_check_branch
      %69 = sbr.rel (0) target = $region29
    $region28: #{autoencoder_forward.1} parent=1 // pred_region
      _
    $region29: #{autoencoder_forward.1} parent=1 // pred_fallthru
      _
    // Predicated region
    $region30: #{autoencoder_forward.1} parent=1 // pred_check
      _
    $region31: #{autoencoder_forward.1} parent=1 // pred_check_branch
      %71 = sbr.rel (0) target = $region33
    $region32: #{autoencoder_forward.1} parent=1 // pred_region
      %s73 = ssub.s32 2048, 2048
      %74 = vsyncadd [#allocation10], %s73
      %s75 = sshll.u32 [#allocation11], 4
      %s76 = int_to_ptr.vmem [resolvable:$true] %s75
      %81 = dma.hbm_to_vmem [thread:$0]  %s7, 2048, %s76, [#allocation10], 128, 128, 8
    $region33: #{autoencoder_forward.1} parent=1 // pred_fallthru
      _
    // Predicated region
    $region34: #{autoencoder_forward.1} parent=1 // pred_check
      _
    $region35: #{autoencoder_forward.1} parent=1 // pred_check_branch
      %83 = sbr.rel (0) target = $region37
    $region36: #{autoencoder_forward.1} parent=1 // pred_region
      _
    $region37: #{autoencoder_forward.1} parent=1 // pred_fallthru
      _
    // Predicated region
    $region38: #{autoencoder_forward.1} parent=1 // pred_check
      _
    $region39: #{autoencoder_forward.1} parent=1 // pred_check_branch
      %85 = sbr.rel (0) target = $region41
    $region40: #{autoencoder_forward.1} parent=1 // pred_region
      %86 = dma.done [#allocation4], 256
    $region41: #{autoencoder_forward.1} parent=1 // pred_fallthru
      _
    // Predicated region
    $region42: #{autoencoder_forward.1} parent=1 // pred_check
      _
    $region43: #{autoencoder_forward.1} parent=1 // pred_check_branch
      %88 = sbr.rel (0) target = $region45
    $region44: #{autoencoder_forward.1} parent=1 // pred_region
      %89 = dma.done [#allocation7], 2048
    $region45: #{autoencoder_forward.1} parent=1 // pred_fallthru
      _
    // Predicated region
    $region46: #{autoencoder_forward.1} parent=1 // pred_check
      _
    $region47: #{autoencoder_forward.1} parent=1 // pred_check_branch
      %91 = sbr.rel (0) target = $region49
    $region48: #{autoencoder_forward.1} parent=1 // pred_region
      %92 = dma.done [#allocation7], 1024
    $region49: #{autoencoder_forward.1} parent=1 // pred_fallthru
      _
    // Predicated region
    $region50: #{autoencoder_forward.1} parent=1 // pred_check
      _
    $region51: #{autoencoder_forward.1} parent=1 // pred_check_branch
      %94 = sbr.rel (0) target = $region53
    $region52: #{autoencoder_forward.1} parent=1 // pred_region
      %95 = dma.done [#allocation10], 1024
    $region53: #{autoencoder_forward.1} parent=1 // pred_fallthru
      _
    // Predicated region
    $region54: #{autoencoder_forward.1} parent=1 // pred_check
      _
    $region55: #{autoencoder_forward.1} parent=1 // pred_check_branch
      %97 = sbr.rel (0) target = $region57
    $region56: #{autoencoder_forward.1} parent=1 // pred_region
      %98 = dma.done [#allocation10], 2048
    $region57: #{autoencoder_forward.1} parent=1 // pred_fallthru
      _
    %100 = vst [vmem:[#allocation2] sm:$0xff] 0.0
    %101 = vst [vmem:[#allocation2 + $0x8] sm:$0xff] 0.0
    %v102 = vld [vmem:[#allocation3] sm:$0xff]
    %v103 = vld [vmem:[#allocation3 + $0x8] sm:$0xff]
    %104 = vst [vmem:[#allocation2] sm:$0xff] %v102
    %vm105 = vcmask 588800
    %106 = vst.msk [vmem:[#allocation2 + $0x8] sm:$0xff] %vm105, %v103
    %v107 = vld [vmem:[#allocation2] sm:$0xff]
    %v108 = vld [vmem:[#allocation2 + $0x8] sm:$0xff]
    %v109 = vpack.c.bf16 %v107, %v107
    %v110 = vpack.c.bf16 %v108, %v108
    %v111 = vld [vmem:[#allocation6] sm:$0xf]
    %v112 = vld [vmem:[#allocation6 + $0x4] sm:$0xf]
    %v113 = vld [vmem:[#allocation6 + $0x8] sm:$0xf]
    %v114 = vld [vmem:[#allocation6 + $0xc] sm:$0xf]
    %v115 = vld [vmem:[#allocation6 + $0x10] sm:$0xf]
    %v116 = vld [vmem:[#allocation6 + $0x14] sm:$0xf]
    %v117 = vld [vmem:[#allocation6 + $0x18] sm:$0xf]
    %v118 = vld [vmem:[#allocation6 + $0x1c] sm:$0xf]
    %v119 = vld [vmem:[#allocation6 + $0x20] sm:$0xf]
    %v120 = vld [vmem:[#allocation6 + $0x24] sm:$0xf]
    %v121 = vld [vmem:[#allocation6 + $0x28] sm:$0xf]
    %v122 = vld [vmem:[#allocation6 + $0x2c] sm:$0xf]
    %v123 = vld [vmem:[#allocation6 + $0x30] sm:$0xf]
    %v124 = vld [vmem:[#allocation6 + $0x34] sm:$0xf]
    %v125 = vld [vmem:[#allocation6 + $0x38] sm:$0xf]
    %v126 = vld [vmem:[#allocation6 + $0x3c] sm:$0xf]
    %v127 = vld [vmem:[#allocation6 + $0x40] sm:$0xf]
    %v128 = vld [vmem:[#allocation6 + $0x44] sm:$0xf]
    %v129 = vld [vmem:[#allocation6 + $0x48] sm:$0xf]
    %v130 = vld [vmem:[#allocation6 + $0x4c] sm:$0xf]
    %v131 = vld [vmem:[#allocation6 + $0x50] sm:$0xf]
    %v132 = vld [vmem:[#allocation6 + $0x54] sm:$0xf]
    %v133 = vld [vmem:[#allocation6 + $0x58] sm:$0xf]
    %v134 = vld [vmem:[#allocation6 + $0x5c] sm:$0xf]
    %v135 = vld [vmem:[#allocation6 + $0x60] sm:$0xf]
    %v136 = vld [vmem:[#allocation6 + $0x64] sm:$0xf]
    %v137 = vld [vmem:[#allocation6 + $0x68] sm:$0xf]
    %v138 = vld [vmem:[#allocation6 + $0x6c] sm:$0xf]
    %v139 = vld [vmem:[#allocation6 + $0x70] sm:$0xf]
    %v140 = vld [vmem:[#allocation6 + $0x74] sm:$0xf]
    %v141 = vld [vmem:[#allocation6 + $0x78] sm:$0xf]
    %v142 = vld [vmem:[#allocation6 + $0x7c] sm:$0xf]
    %v143 = vld [vmem:[%s2] sm:$0x1]
    %v145 = vlaneseq
    %v146 = vshrl.u32 %v145, 7
    %v147 = vsub.s32 0, %v146
    %v148 = vrot.slane %v143, %v147
    %v182 = vunpack.c.l.b16 %v111
    %v183 = vunpack.c.l.b16 %v112
    %v184 = vunpack.c.l.b16 %v113
    %v185 = vunpack.c.l.b16 %v114
    %v186 = vunpack.c.l.b16 %v115
    %v187 = vunpack.c.l.b16 %v116
    %v188 = vunpack.c.l.b16 %v117
    %v189 = vunpack.c.l.b16 %v118
    %v190 = vunpack.c.l.b16 %v119
    %v191 = vunpack.c.l.b16 %v120
    %v192 = vunpack.c.l.b16 %v121
    %v193 = vunpack.c.l.b16 %v122
    %v194 = vunpack.c.l.b16 %v123
    %v195 = vunpack.c.l.b16 %v124
    %v196 = vunpack.c.l.b16 %v125
    %v197 = vunpack.c.l.b16 %v126
    %v198 = vunpack.c.l.b16 %v127
    %v199 = vunpack.c.l.b16 %v128
    %v200 = vunpack.c.l.b16 %v129
    %v201 = vunpack.c.l.b16 %v130
    %v202 = vunpack.c.l.b16 %v131
    %v203 = vunpack.c.l.b16 %v132
    %v204 = vunpack.c.l.b16 %v133
    %v205 = vunpack.c.l.b16 %v134
    %v206 = vunpack.c.l.b16 %v135
    %v207 = vunpack.c.l.b16 %v136
    %v208 = vunpack.c.l.b16 %v137
    %v209 = vunpack.c.l.b16 %v138
    %v210 = vunpack.c.l.b16 %v139
    %v211 = vunpack.c.l.b16 %v140
    %v212 = vunpack.c.l.b16 %v141
    %v213 = vunpack.c.l.b16 %v142
    %v214 = vpack.c.b16 %v183, %v182
    %v215 = vpack.c.b16 %v185, %v184
    %v216 = vpack.c.b16 %v187, %v186
    %v217 = vpack.c.b16 %v189, %v188
    %v218 = vpack.c.b16 %v191, %v190
    %v219 = vpack.c.b16 %v193, %v192
    %v220 = vpack.c.b16 %v195, %v194
    %v221 = vpack.c.b16 %v197, %v196
    %v222 = vpack.c.b16 %v199, %v198
    %v223 = vpack.c.b16 %v201, %v200
    %v224 = vpack.c.b16 %v203, %v202
    %v225 = vpack.c.b16 %v205, %v204
    %v226 = vpack.c.b16 %v207, %v206
    %v227 = vpack.c.b16 %v209, %v208
    %v228 = vpack.c.b16 %v211, %v210
    %v229 = vpack.c.b16 %v213, %v212
    %246 = vmatprep.subr.bf16.mxu0 0
    %247 = vmatpush1.bf16.msra.mxu0 %v214
    %248 = vmatprep.subr.bf16.mxu0 0
    %249 = vmatpush1.bf16.msra.mxu0 %v215
    %250 = vmatprep.subr.bf16.mxu0 0
    %251 = vmatpush1.bf16.msra.mxu0 %v216
    %252 = vmatprep.subr.bf16.mxu0 0
    %253 = vmatpush1.bf16.msra.mxu0 %v217
    %254 = vmatprep.subr.bf16.mxu0 0
    %255 = vmatpush1.bf16.msra.mxu0 %v218
    %256 = vmatprep.subr.bf16.mxu0 0
    %257 = vmatpush1.bf16.msra.mxu0 %v219
    %258 = vmatprep.subr.bf16.mxu0 0
    %259 = vmatpush1.bf16.msra.mxu0 %v220
    %260 = vmatprep.subr.bf16.mxu0 0
    %261 = vmatpush1.bf16.msra.mxu0 %v221
    %262 = vmatprep.subr.bf16.mxu0 0
    %263 = vmatpush1.bf16.msra.mxu0 %v222
    %264 = vmatprep.subr.bf16.mxu0 0
    %265 = vmatpush1.bf16.msra.mxu0 %v223
    %266 = vmatprep.subr.bf16.mxu0 0
    %267 = vmatpush1.bf16.msra.mxu0 %v224
    %268 = vmatprep.subr.bf16.mxu0 0
    %269 = vmatpush1.bf16.msra.mxu0 %v225
    %270 = vmatprep.subr.bf16.mxu0 0
    %271 = vmatpush1.bf16.msra.mxu0 %v226
    %272 = vmatprep.subr.bf16.mxu0 0
    %273 = vmatpush1.bf16.msra.mxu0 %v227
    %274 = vmatprep.subr.bf16.mxu0 0
    %275 = vmatpush1.bf16.msra.mxu0 %v228
    %276 = vmatprep.subr.bf16.mxu0 0
    %277 = vmatpush1.bf16.msra.mxu0 %v229
    %278 = vmatprep.mubr.bf16.mxu0 %v110
    %279 = vmatmul.mubr.bf16.gmra.mrb[0].mxu0 %v109
    %v280 = vpop.f32.mrb[0].mxu0
    %v281 = vadd.f32 %v148, %v280
    %v282 = vpop.f32.mrb[0].mxu0
    %v283 = vpop.f32.mrb[0].mxu0
    %v284 = vpop.f32.mrb[0].mxu0
    %285 = vdwg.mxu0
    %v286 = vxor.u32 %v281, 2147483648
    %v287 = vmul.f32 %v286, 1.442695
    %v288 = vpow.pop %v287
    %v289 = vadd.f32 %v288, 1.0
    %v290 = vrcp.pop %v289
    %v291 = vmul.f32 1.0, %v290
    %v292 = vpack.c.bf16 %v291, %v291
    %v293 = vld [vmem:[#allocation8] sm:$0xf]
    %v294 = vld [vmem:[#allocation8 + $0x4] sm:$0xf]
    %v295 = vld [vmem:[#allocation8 + $0x8] sm:$0xf]
    %v296 = vld [vmem:[#allocation8 + $0xc] sm:$0xf]
    %v297 = vld [vmem:[#allocation8 + $0x10] sm:$0xf]
    %v298 = vld [vmem:[#allocation8 + $0x14] sm:$0xf]
    %v299 = vld [vmem:[#allocation8 + $0x18] sm:$0xf]
    %v300 = vld [vmem:[#allocation8 + $0x1c] sm:$0xf]
    %v301 = vld [vmem:[#allocation8 + $0x20] sm:$0xf]
    %v302 = vld [vmem:[#allocation8 + $0x24] sm:$0xf]
    %v303 = vld [vmem:[#allocation8 + $0x28] sm:$0xf]
    %v304 = vld [vmem:[#allocation8 + $0x2c] sm:$0xf]
    %v305 = vld [vmem:[#allocation8 + $0x30] sm:$0xf]
    %v306 = vld [vmem:[#allocation8 + $0x34] sm:$0xf]
    %v307 = vld [vmem:[#allocation8 + $0x38] sm:$0xf]
    %v308 = vld [vmem:[#allocation8 + $0x3c] sm:$0xf]
    %v309 = vld [vmem:[%s4] sm:$0x1]
    %v311 = vlaneseq
    %v312 = vshrl.u32 %v311, 7
    %v313 = vsub.s32 0, %v312
    %v314 = vrot.slane %v309, %v313
    %v332 = vunpack.c.l.b16 %v293
    %v333 = vunpack.c.l.b16 %v294
    %v334 = vunpack.c.l.b16 %v295
    %v335 = vunpack.c.l.b16 %v296
    %v336 = vunpack.c.l.b16 %v297
    %v337 = vunpack.c.l.b16 %v298
    %v338 = vunpack.c.l.b16 %v299
    %v339 = vunpack.c.l.b16 %v300
    %v340 = vunpack.c.l.b16 %v301
    %v341 = vunpack.c.l.b16 %v302
    %v342 = vunpack.c.l.b16 %v303
    %v343 = vunpack.c.l.b16 %v304
    %v344 = vunpack.c.l.b16 %v305
    %v345 = vunpack.c.l.b16 %v306
    %v346 = vunpack.c.l.b16 %v307
    %v347 = vunpack.c.l.b16 %v308
    %v348 = vpack.c.b16 %v333, %v332
    %v349 = vpack.c.b16 %v335, %v334
    %v350 = vpack.c.b16 %v337, %v336
    %v351 = vpack.c.b16 %v339, %v338
    %v352 = vpack.c.b16 %v341, %v340
    %v353 = vpack.c.b16 %v343, %v342
    %v354 = vpack.c.b16 %v345, %v344
    %v355 = vpack.c.b16 %v347, %v346
    %364 = vmatprep.subr.bf16.mxu0 0
    %365 = vmatpush1.bf16.msra.mxu0 %v348
    %366 = vmatprep.subr.bf16.mxu0 0
    %367 = vmatpush1.bf16.msra.mxu0 %v349
    %368 = vmatprep.subr.bf16.mxu0 0
    %369 = vmatpush1.bf16.msra.mxu0 %v350
    %370 = vmatprep.subr.bf16.mxu0 0
    %371 = vmatpush1.bf16.msra.mxu0 %v351
    %372 = vmatprep.subr.bf16.mxu0 0
    %373 = vmatpush1.bf16.msra.mxu0 %v352
    %374 = vmatprep.subr.bf16.mxu0 0
    %375 = vmatpush1.bf16.msra.mxu0 %v353
    %376 = vmatprep.subr.bf16.mxu0 0
    %377 = vmatpush1.bf16.msra.mxu0 %v354
    %378 = vmatprep.subr.bf16.mxu0 0
    %379 = vmatpush1.bf16.msra.mxu0 %v355
    %380 = vmatprep.subr.bf16.mxu0 0
    %381 = vmatpush1.bf16.msra.mxu0 0
    %382 = vmatprep.subr.bf16.mxu0 0
    %383 = vmatpush1.bf16.msra.mxu0 0
    %384 = vmatprep.subr.bf16.mxu0 0
    %385 = vmatpush1.bf16.msra.mxu0 0
    %386 = vmatprep.subr.bf16.mxu0 0
    %387 = vmatpush1.bf16.msra.mxu0 0
    %388 = vmatprep.subr.bf16.mxu0 0
    %389 = vmatpush1.bf16.msra.mxu0 0
    %390 = vmatprep.subr.bf16.mxu0 0
    %391 = vmatpush1.bf16.msra.mxu0 0
    %392 = vmatprep.subr.bf16.mxu0 0
    %393 = vmatpush1.bf16.msra.mxu0 0
    %394 = vmatprep.subr.bf16.mxu0 0
    %395 = vmatpush1.bf16.msra.mxu0 0
    %396 = vmatprep.mubr.bf16.mxu0 0
    %397 = vmatmul.mubr.bf16.gmra.mrb[0].mxu0 %v292
    %v398 = vpop.f32.mrb[0].mxu0
    %v399 = vadd.f32 %v314, %v398
    %v400 = vpop.f32.mrb[0].mxu0
    %v401 = vpop.f32.mrb[0].mxu0
    %v402 = vpop.f32.mrb[0].mxu0
    %403 = vdwg.mxu0
    %v404 = vxor.u32 %v399, 2147483648
    %v405 = vmul.f32 %v404, 1.442695
    %v406 = vpow.pop %v405
    %v407 = vadd.f32 %v406, 1.0
    %v408 = vrcp.pop %v407
    %v409 = vmul.f32 1.0, %v408
    %v410 = vpack.c.bf16 %v409, %v409
    %v411 = vld [vmem:[#allocation9] sm:$0xf]
    %v412 = vld [vmem:[#allocation9 + $0x4] sm:$0xf]
    %v413 = vld [vmem:[#allocation9 + $0x8] sm:$0xf]
    %v414 = vld [vmem:[#allocation9 + $0xc] sm:$0xf]
    %v415 = vld [vmem:[#allocation9 + $0x10] sm:$0xf]
    %v416 = vld [vmem:[#allocation9 + $0x14] sm:$0xf]
    %v417 = vld [vmem:[#allocation9 + $0x18] sm:$0xf]
    %v418 = vld [vmem:[#allocation9 + $0x1c] sm:$0xf]
    %v419 = vld [vmem:[#allocation9 + $0x20] sm:$0xf]
    %v420 = vld [vmem:[#allocation9 + $0x24] sm:$0xf]
    %v421 = vld [vmem:[#allocation9 + $0x28] sm:$0xf]
    %v422 = vld [vmem:[#allocation9 + $0x2c] sm:$0xf]
    %v423 = vld [vmem:[#allocation9 + $0x30] sm:$0xf]
    %v424 = vld [vmem:[#allocation9 + $0x34] sm:$0xf]
    %v425 = vld [vmem:[#allocation9 + $0x38] sm:$0xf]
    %v426 = vld [vmem:[#allocation9 + $0x3c] sm:$0xf]
    %v427 = vld [vmem:[%s6] sm:$0x1]
    %v429 = vlaneseq
    %v430 = vshrl.u32 %v429, 7
    %v431 = vsub.s32 0, %v430
    %v432 = vrot.slane %v427, %v431
    %v450 = vunpack.c.l.b16 %v411
    %v451 = vunpack.c.l.b16 %v412
    %v452 = vunpack.c.l.b16 %v413
    %v453 = vunpack.c.l.b16 %v414
    %v454 = vunpack.c.l.b16 %v415
    %v455 = vunpack.c.l.b16 %v416
    %v456 = vunpack.c.l.b16 %v417
    %v457 = vunpack.c.l.b16 %v418
    %v458 = vunpack.c.l.b16 %v419
    %v459 = vunpack.c.l.b16 %v420
    %v460 = vunpack.c.l.b16 %v421
    %v461 = vunpack.c.l.b16 %v422
    %v462 = vunpack.c.l.b16 %v423
    %v463 = vunpack.c.l.b16 %v424
    %v464 = vunpack.c.l.b16 %v425
    %v465 = vunpack.c.l.b16 %v426
    %v466 = vpack.c.b16 %v451, %v450
    %v467 = vpack.c.b16 %v453, %v452
    %v468 = vpack.c.b16 %v455, %v454
    %v469 = vpack.c.b16 %v457, %v456
    %v470 = vpack.c.b16 %v459, %v458
    %v471 = vpack.c.b16 %v461, %v460
    %v472 = vpack.c.b16 %v463, %v462
    %v473 = vpack.c.b16 %v465, %v464
    %482 = vmatprep.subr.bf16.mxu0 0
    %483 = vmatpush1.bf16.msra.mxu0 %v466
    %484 = vmatprep.subr.bf16.mxu0 0
    %485 = vmatpush1.bf16.msra.mxu0 %v467
    %486 = vmatprep.subr.bf16.mxu0 0
    %487 = vmatpush1.bf16.msra.mxu0 %v468
    %488 = vmatprep.subr.bf16.mxu0 0
    %489 = vmatpush1.bf16.msra.mxu0 %v469
    %490 = vmatprep.subr.bf16.mxu0 0
    %491 = vmatpush1.bf16.msra.mxu0 %v470
    %492 = vmatprep.subr.bf16.mxu0 0
    %493 = vmatpush1.bf16.msra.mxu0 %v471
    %494 = vmatprep.subr.bf16.mxu0 0
    %495 = vmatpush1.bf16.msra.mxu0 %v472
    %496 = vmatprep.subr.bf16.mxu0 0
    %497 = vmatpush1.bf16.msra.mxu0 %v473
    %498 = vmatprep.subr.bf16.mxu0 0
    %499 = vmatpush1.bf16.msra.mxu0 0
    %500 = vmatprep.subr.bf16.mxu0 0
    %501 = vmatpush1.bf16.msra.mxu0 0
    %502 = vmatprep.subr.bf16.mxu0 0
    %503 = vmatpush1.bf16.msra.mxu0 0
    %504 = vmatprep.subr.bf16.mxu0 0
    %505 = vmatpush1.bf16.msra.mxu0 0
    %506 = vmatprep.subr.bf16.mxu0 0
    %507 = vmatpush1.bf16.msra.mxu0 0
    %508 = vmatprep.subr.bf16.mxu0 0
    %509 = vmatpush1.bf16.msra.mxu0 0
    %510 = vmatprep.subr.bf16.mxu0 0
    %511 = vmatpush1.bf16.msra.mxu0 0
    %512 = vmatprep.subr.bf16.mxu0 0
    %513 = vmatpush1.bf16.msra.mxu0 0
    %514 = vmatprep.mubr.bf16.mxu0 0
    %515 = vmatmul.mubr.bf16.gmra.mrb[0].mxu0 %v410
    %v516 = vpop.f32.mrb[0].mxu0
    %v517 = vadd.f32 %v432, %v516
    %v518 = vpop.f32.mrb[0].mxu0
    %v519 = vpop.f32.mrb[0].mxu0
    %v520 = vpop.f32.mrb[0].mxu0
    %521 = vdwg.mxu0
    %v522 = vxor.u32 %v517, 2147483648
    %v523 = vmul.f32 %v522, 1.442695
    %v524 = vpow.pop %v523
    %v525 = vadd.f32 %v524, 1.0
    %v526 = vrcp.pop %v525
    %v527 = vmul.f32 1.0, %v526
    %v528 = vpack.c.bf16 %v527, %v527
    %v529 = vld [vmem:[#allocation11] sm:$0xff]
    %v530 = vld [vmem:[#allocation11 + $0x8] sm:$0xff]
    %v531 = vld [vmem:[#allocation11 + $0x10] sm:$0xff]
    %v532 = vld [vmem:[#allocation11 + $0x18] sm:$0xff]
    %v533 = vld [vmem:[#allocation11 + $0x20] sm:$0xff]
    %v534 = vld [vmem:[#allocation11 + $0x28] sm:$0xff]
    %v535 = vld [vmem:[#allocation11 + $0x30] sm:$0xff]
    %v536 = vld [vmem:[#allocation11 + $0x38] sm:$0xff]
    %v537 = vld [vmem:[#allocation11 + $0x40] sm:$0xff]
    %v538 = vld [vmem:[#allocation11 + $0x48] sm:$0xff]
    %v539 = vld [vmem:[#allocation11 + $0x50] sm:$0xff]
    %v540 = vld [vmem:[#allocation11 + $0x58] sm:$0xff]
    %v541 = vld [vmem:[#allocation11 + $0x60] sm:$0xff]
    %v542 = vld [vmem:[#allocation11 + $0x68] sm:$0xff]
    %v543 = vld [vmem:[#allocation11 + $0x70] sm:$0xff]
    %v544 = vld [vmem:[#allocation11 + $0x78] sm:$0xff]
    %v545 = vld [vmem:[%s8] sm:$0x3]
    %v547 = vlaneseq
    %v548 = vshrl.u32 %v547, 7
    %v549 = vsub.s32 0, %v548
    %v550 = vrot.slane %v545, %v549
    %v551 = vlaneseq
    %v552 = vshrl.u32 %v551, 7
    %v553 = vsub.s32 1, %v552
    %v554 = vrot.slane %v545, %v553
    %v573 = vunpack.c.l.b16 %v529
    %v574 = vunpack.c.h.b16 %v529
    %v575 = vunpack.c.l.b16 %v530
    %v576 = vunpack.c.h.b16 %v530
    %v577 = vunpack.c.l.b16 %v531
    %v578 = vunpack.c.h.b16 %v531
    %v579 = vunpack.c.l.b16 %v532
    %v580 = vunpack.c.h.b16 %v532
    %v581 = vunpack.c.l.b16 %v533
    %v582 = vunpack.c.h.b16 %v533
    %v583 = vunpack.c.l.b16 %v534
    %v584 = vunpack.c.h.b16 %v534
    %v585 = vunpack.c.l.b16 %v535
    %v586 = vunpack.c.h.b16 %v535
    %v587 = vunpack.c.l.b16 %v536
    %v588 = vunpack.c.h.b16 %v536
    %v589 = vunpack.c.l.b16 %v537
    %v590 = vunpack.c.h.b16 %v537
    %v591 = vunpack.c.l.b16 %v538
    %v592 = vunpack.c.h.b16 %v538
    %v593 = vunpack.c.l.b16 %v539
    %v594 = vunpack.c.h.b16 %v539
    %v595 = vunpack.c.l.b16 %v540
    %v596 = vunpack.c.h.b16 %v540
    %v597 = vunpack.c.l.b16 %v541
    %v598 = vunpack.c.h.b16 %v541
    %v599 = vunpack.c.l.b16 %v542
    %v600 = vunpack.c.h.b16 %v542
    %v601 = vunpack.c.l.b16 %v543
    %v602 = vunpack.c.h.b16 %v543
    %v603 = vunpack.c.l.b16 %v544
    %v604 = vunpack.c.h.b16 %v544
    %v605 = vpack.c.b16 %v575, %v573
    %v606 = vpack.c.b16 %v576, %v574
    %v607 = vpack.c.b16 %v579, %v577
    %v608 = vpack.c.b16 %v580, %v578
    %v609 = vpack.c.b16 %v583, %v581
    %v610 = vpack.c.b16 %v584, %v582
    %v611 = vpack.c.b16 %v587, %v585
    %v612 = vpack.c.b16 %v588, %v586
    %v613 = vpack.c.b16 %v591, %v589
    %v614 = vpack.c.b16 %v592, %v590
    %v615 = vpack.c.b16 %v595, %v593
    %v616 = vpack.c.b16 %v596, %v594
    %v617 = vpack.c.b16 %v599, %v597
    %v618 = vpack.c.b16 %v600, %v598
    %v619 = vpack.c.b16 %v603, %v601
    %v620 = vpack.c.b16 %v604, %v602
    %637 = vmatprep.subr.bf16.mxu0 %v606
    %638 = vmatpush1.bf16.msra.mxu0 %v605
    %639 = vmatprep.subr.bf16.mxu0 %v608
    %640 = vmatpush1.bf16.msra.mxu0 %v607
    %641 = vmatprep.subr.bf16.mxu0 %v610
    %642 = vmatpush1.bf16.msra.mxu0 %v609
    %643 = vmatprep.subr.bf16.mxu0 %v612
    %644 = vmatpush1.bf16.msra.mxu0 %v611
    %645 = vmatprep.subr.bf16.mxu0 %v614
    %646 = vmatpush1.bf16.msra.mxu0 %v613
    %647 = vmatprep.subr.bf16.mxu0 %v616
    %648 = vmatpush1.bf16.msra.mxu0 %v615
    %649 = vmatprep.subr.bf16.mxu0 %v618
    %650 = vmatpush1.bf16.msra.mxu0 %v617
    %651 = vmatprep.subr.bf16.mxu0 %v620
    %652 = vmatpush1.bf16.msra.mxu0 %v619
    %653 = vmatprep.subr.bf16.mxu0 0
    %654 = vmatpush1.bf16.msra.mxu0 0
    %655 = vmatprep.subr.bf16.mxu0 0
    %656 = vmatpush1.bf16.msra.mxu0 0
    %657 = vmatprep.subr.bf16.mxu0 0
    %658 = vmatpush1.bf16.msra.mxu0 0
    %659 = vmatprep.subr.bf16.mxu0 0
    %660 = vmatpush1.bf16.msra.mxu0 0
    %661 = vmatprep.subr.bf16.mxu0 0
    %662 = vmatpush1.bf16.msra.mxu0 0
    %663 = vmatprep.subr.bf16.mxu0 0
    %664 = vmatpush1.bf16.msra.mxu0 0
    %665 = vmatprep.subr.bf16.mxu0 0
    %666 = vmatpush1.bf16.msra.mxu0 0
    %667 = vmatprep.subr.bf16.mxu0 0
    %668 = vmatpush1.bf16.msra.mxu0 0
    %669 = vmatprep.mubr.bf16.mxu0 0
    %670 = vmatmul.mubr.bf16.gmra.mrb[0].mxu0 %v528
    %v671 = vpop.f32.mrb[0].mxu0
    %v672 = vadd.f32 %v550, %v671
    %v673 = vpop.f32.mrb[0].mxu0
    %v674 = vadd.f32 %v554, %v673
    %v675 = vpop.f32.mrb[0].mxu0
    %v676 = vpop.f32.mrb[0].mxu0
    %677 = vdwg.mxu0
    %678 = vst [vmem:[#allocation12] sm:$0xff] %v672
    %679 = vst.msk [vmem:[#allocation12 + $0x8] sm:$0xff] %vm105, %v674
    // Predicated region
    $region58: #{autoencoder_forward.1} parent=1 // pred_check
      _
    $region59: #{autoencoder_forward.1} parent=1 // pred_check_branch
      %681 = sbr.rel (0) target = $region61
    $region60: #{autoencoder_forward.1} parent=1 // pred_region
      %s683 = ssub.s32 256, 256
      %684 = vsyncadd [#allocation5], %s683
      %s686 = sshll.u32 [#allocation12], 4
      %s687 = int_to_ptr.vmem [resolvable:$true] %s686
      %689 = dma.vmem_to_hbm [thread:$0]  %s687, 256, %s9, [#allocation5]
    $region61: #{autoencoder_forward.1} parent=1 // pred_fallthru
      _
    // Predicated region
    $region62: #{autoencoder_forward.1} parent=1 // pred_check
      _
    $region63: #{autoencoder_forward.1} parent=1 // pred_check_branch
      %691 = sbr.rel (0) target = $region65
    $region64: #{autoencoder_forward.1} parent=1 // pred_region
      %692 = dma.done [#allocation5], 256
    $region65: #{autoencoder_forward.1} parent=1 // pred_fallthru
      _
    %693 = vsyncpa [#allocation4], 1
    %694 = vsyncpa [#allocation7], 1
    %695 = vsyncpa [#allocation10], 1
    %696 = vsyncpa [#allocation5], 1

</llo_original>
